<compile_context>
chip_gen: v5e
topology: v5e:2x2
jax: 0.10.0
libtpu: 0.0.40
codegen_flags: <defaults>
</compile_context>

<pallas_src>
import jax
import jax.numpy as jnp
from jax.experimental import pallas as pl
from jax.experimental.pallas import tpu as pltpu

# ---- static problem configuration ------------------------------------------
N = 8            # sequences per call (lane-packed: N*L = 128 -> full-lane vregs)
C = 8            # in_channels == out_channels
L = 16           # sequence length
K = 3            # kernel_size
STRIDE = 1
DILATION = 1
PAD = (K - 1) * DILATION      # causal left padding -> output length == L
NL = N * L
KC = K * C

SLAB_LANES = 128              # parameter slab lane width (one f32 vreg row)
PARAM_COLS = 2 * KC + 2       # w1 | w2 | b1 | b2
assert PARAM_COLS <= SLAB_LANES


def basic_block_kernel(x_ref, p_ref, o_ref):
    """Single invocation (no grid); whole problem lives in VMEM.

    x_ref : (C, N*L)        activations, lane-batched: lane n*L+l = sample n, time l
    p_ref : (C, SLAB_LANES) parameter slab:
                            lanes [0:KC)        = w1_im  (w_im[co, k*C+ci] = W1[co, ci, k])
                            lanes [KC:2KC)      = w2_im
                            lane  2KC           = b1
                            lane  2KC+1         = b2
    o_ref : (C, N*L)        lane-dense output slab (same lane layout as x_ref)
    """
    x = x_ref[...]                                  # (C, N*L), one full vreg row set
    w1 = p_ref[:, 0:KC]                             # (C, K*C)  static slab views
    w2 = p_ref[:, KC:2 * KC]
    b1 = p_ref[:, 2 * KC:2 * KC + 1]                # (C, 1)
    b2 = p_ref[:, 2 * KC + 1:2 * KC + 2]

    # Hoisted constants — materialized once, reused by both convs
    # (JAX does not CSE broadcast_in_dim; review item #4).
    zpad = jnp.zeros((C, PAD), jnp.float32)
    zfull = jnp.zeros((C, NL), jnp.float32)
    col = jax.lax.broadcasted_iota(jnp.int32, (C, NL), 1)
    if (L & (L - 1)) == 0:                          # L power of two -> cheap AND
        l_in_seq = jnp.bitwise_and(col, L - 1)
    else:
        l_in_seq = col % L
    shifts = sorted({(K - 1 - k) * DILATION for k in range(K - 1)})
    valid = {s: l_in_seq >= s for s in shifts}      # per-sequence causal masks

    def causal_conv_relu(v, w, b):
        # im2col RHS (K*C, N*L), built ONCE for all N sequences: tap k uses the
        # input shifted right by s = (K-1-k)*dilation lanes, with per-sequence
        # head columns zeroed == causal left padding fused in registers.
        blocks = []
        for k in range(K):
            s = (K - 1 - k) * DILATION
            if s == 0:
                blocks.append(v)
            else:
                sh = jnp.concatenate([zpad[:, :s], v[:, :NL - s]], axis=1)
                blocks.append(jnp.where(valid[s], sh, zfull))
        im = jnp.concatenate(blocks, axis=0)        # (K*C, N*L) = (24, 128)
        # One MXU matmul per conv for the whole batch (review item #1).
        # (On v5e, casting w/im to bf16 here would hit the native MXU path.)
        y = jnp.dot(w, im, preferred_element_type=jnp.float32) + b
        return jnp.maximum(y, 0.0)                  # ReLU (dropout = identity at eval)

    h = causal_conv_relu(x, w1, b1)                 # conv1 -> relu1 -> dropout1(id)
    g = causal_conv_relu(h, w2, b2)                 # conv2 -> relu2 -> dropout2(id)
    # Identity shortcut + final ReLU; single full-128-lane store (review item #3).
    o_ref[...] = jnp.maximum(g + x, 0.0)


def _pack_params(w1, b1, w2, b2):
    # im2col weight packing + single (C, 128) aligned parameter slab -> 1 DMA
    # (review item #2). In a real model this is one-time parameter prep.
    w1_im = jnp.transpose(w1, (0, 2, 1)).reshape(C, KC).astype(jnp.float32)
    w2_im = jnp.transpose(w2, (0, 2, 1)).reshape(C, KC).astype(jnp.float32)
    pad = jnp.zeros((C, SLAB_LANES - PARAM_COLS), jnp.float32)
    return jnp.concatenate(
        [w1_im, w2_im,
         b1.reshape(C, 1).astype(jnp.float32),
         b2.reshape(C, 1).astype(jnp.float32),
         pad], axis=1)                              # (C, 128)


@jax.jit
def basic_block(x_ncl, w1, b1, w2, b2):
    """x_ncl: (N, C, L) float32 (PyTorch Conv1d layout). Weights (C_out, C_in, K)."""
    params = _pack_params(w1, b1, w2, b2)                               # (8, 128)
    # Layout plumbing (not compute): present a lane-dense (C, N*L) slab so the
    # kernel's loads/stores are full-128-lane and it does zero re-layout work.
    x_cl = jnp.transpose(x_ncl.astype(jnp.float32), (1, 0, 2)).reshape(C, NL)

    out_cl = pl.pallas_call(
        basic_block_kernel,
        out_shape=jax.ShapeDtypeStruct((C, NL), jnp.float32),
        # No grid (review item #6): single invocation, whole arrays in VMEM,
        # no pipeline prologue / unused double buffers. 2 input DMAs total.
        in_specs=[
            pl.BlockSpec(memory_space=pltpu.MemorySpace.VMEM),   # activation slab
            pl.BlockSpec(memory_space=pltpu.MemorySpace.VMEM),   # parameter slab
        ],
        out_specs=pl.BlockSpec(memory_space=pltpu.MemorySpace.VMEM),
    )(x_cl, params)

    # Back to PyTorch NCL layout (tiny wrapper-side relayout, fuses under jit).
    return jnp.transpose(out_cl.reshape(C, N, L), (1, 0, 2))


# ---- plain-JAX helpers (parameter setup + reference check) ------------------
def weight_norm_weight(v, g):
    # v: (C_out, C_in, K), g: (C_out,)  ->  g * v / ||v||_2 (per out-channel)
    norm = jnp.sqrt(jnp.sum(v * v, axis=(1, 2), keepdims=True))
    return g.reshape(-1, 1, 1) * v / norm


def reference(x_ncl, w1, b1, w2, b2):
    x = jnp.transpose(x_ncl, (0, 2, 1))                         # (N, L, C)

    def conv(inp, w, b):
        xp = jnp.pad(inp, ((0, 0), (PAD, 0), (0, 0)))
        wk = jnp.transpose(w, (2, 1, 0))                        # (K, C_in, C_out)
        y = sum(xp[:, k * DILATION:k * DILATION + L, :] @ wk[k] for k in range(K))
        return y + b.reshape(1, 1, C)

    h = jax.nn.relu(conv(x, w1, b1))
    g = jax.nn.relu(conv(h, w2, b2))
    y = jax.nn.relu(g + x)
    return jnp.transpose(y, (0, 2, 1))


if __name__ == "__main__":
    key = jax.random.PRNGKey(0)
    kx, kv1, kv2, kb1, kb2 = jax.random.split(key, 5)

    x = jax.random.normal(kx, (N, C, L), jnp.float32)

    # deterministic parameter init (shapes from the module __init__)
    v1 = 0.01 * jax.random.normal(kv1, (C, C, K), jnp.float32)  # conv1 weight_v
    v2 = 0.01 * jax.random.normal(kv2, (C, C, K), jnp.float32)  # conv2 weight_v
    g1 = jnp.sqrt(jnp.sum(v1 * v1, axis=(1, 2)))                # conv1 weight_g
    g2 = jnp.sqrt(jnp.sum(v2 * v2, axis=(1, 2)))                # conv2 weight_g
    b1 = 0.01 * jax.random.normal(kb1, (C,), jnp.float32)
    b2 = 0.01 * jax.random.normal(kb2, (C,), jnp.float32)

    w1 = weight_norm_weight(v1, g1)                             # (C_out, C_in, K)
    w2 = weight_norm_weight(v2, g2)

    out = jax.block_until_ready(basic_block(x, w1, b1, w2, b2))
    ref = reference(x, w1, b1, w2, b2)

    assert out.shape == (N, C, L), out.shape
    max_err = float(jnp.max(jnp.abs(out - ref)))
    assert jnp.allclose(out, ref, atol=1e-5, rtol=1e-5), max_err
    print("KERNEL_OK")
</pallas_src>

<mosaic_0001>
module attributes {stable_mosaic.version = 11 : i64} {
  func.func @basic_block_kernel(%arg0: memref<8x128xf32, #tpu.memory_space<vmem>>, %arg1: memref<8x128xf32, #tpu.memory_space<vmem>>, %arg2: memref<8x128xf32, #tpu.memory_space<vmem>>) attributes {dimension_semantics = [], scalar_prefetch = 0 : i64, scratch_operands = 0 : i64, tpu.core_type = #tpu.core_type<tc>} {
    %c0 = arith.constant 0 : index
    %c0_0 = arith.constant 0 : index
    %0 = vector.load %arg0[%c0, %c0_0] : memref<8x128xf32, #tpu.memory_space<vmem>>, vector<8x128xf32>
    %c0_1 = arith.constant 0 : index
    %c0_2 = arith.constant 0 : index
    %1 = vector.load %arg1[%c0_1, %c0_2] : memref<8x128xf32, #tpu.memory_space<vmem>>, vector<8x24xf32>
    %c0_3 = arith.constant 0 : index
    %c24 = arith.constant 24 : index
    %2 = vector.load %arg1[%c0_3, %c24] : memref<8x128xf32, #tpu.memory_space<vmem>>, vector<8x24xf32>
    %c0_4 = arith.constant 0 : index
    %c48 = arith.constant 48 : index
    %3 = vector.load %arg1[%c0_4, %c48] : memref<8x128xf32, #tpu.memory_space<vmem>>, vector<8x1xf32>
    %c0_5 = arith.constant 0 : index
    %c49 = arith.constant 49 : index
    %4 = vector.load %arg1[%c0_5, %c49] : memref<8x128xf32, #tpu.memory_space<vmem>>, vector<8x1xf32>
    %cst = arith.constant 0.000000e+00 : f32
    %5 = vector.broadcast %cst : f32 to vector<8x2xf32>
    %cst_6 = arith.constant 0.000000e+00 : f32
    %6 = vector.broadcast %cst_6 : f32 to vector<8x128xf32>
    %7 = tpu.iota {dimensions = array<i32: 1>} : vector<8x128xi32>
    %c15_i32 = arith.constant 15 : i32
    %8 = vector.broadcast %c15_i32 : i32 to vector<8x128xi32>
    %9 = arith.andi %7, %8 : vector<8x128xi32>
    %c1_i32 = arith.constant 1 : i32
    %10 = vector.broadcast %c1_i32 : i32 to vector<8x128xi32>
    %11 = arith.cmpi sge, %9, %10 : vector<8x128xi32>
    %c2_i32 = arith.constant 2 : i32
    %12 = vector.broadcast %c2_i32 : i32 to vector<8x128xi32>
    %13 = arith.cmpi sge, %9, %12 : vector<8x128xi32>
    %14 = vector.extract_strided_slice %0 {offsets = [0, 0], sizes = [8, 126], strides = [1, 1]} : vector<8x128xf32> to vector<8x126xf32>
    %15 = tpu.concatenate %5, %14 in 1 : vector<8x2xf32>, vector<8x126xf32> -> vector<8x128xf32>
    %16 = arith.select %13, %15, %6 : vector<8x128xi1>, vector<8x128xf32>
    %17 = vector.extract_strided_slice %5 {offsets = [0, 0], sizes = [8, 1], strides = [1, 1]} : vector<8x2xf32> to vector<8x1xf32>
    %18 = vector.extract_strided_slice %0 {offsets = [0, 0], sizes = [8, 127], strides = [1, 1]} : vector<8x128xf32> to vector<8x127xf32>
    %19 = tpu.concatenate %17, %18 in 1 : vector<8x1xf32>, vector<8x127xf32> -> vector<8x128xf32>
    %20 = arith.select %11, %19, %6 : vector<8x128xi1>, vector<8x128xf32>
    %21 = tpu.concatenate %16, %20, %0 in 0 : vector<8x128xf32>, vector<8x128xf32>, vector<8x128xf32> -> vector<24x128xf32>
    %cst_7 = arith.constant dense<0.000000e+00> : vector<8x128xf32>
    %22 = tpu.matmul %1, %21, %cst_7 {dimension_numbers = #tpu.dot_dimension_numbers<[1], [0], [0], [1], [0, 0, 1, 1], [], []>} : vector<8x24xf32>, vector<24x128xf32>, vector<8x128xf32> -> vector<8x128xf32>
    %23 = vector.broadcast %3 : vector<8x1xf32> to vector<8x128xf32>
    %24 = arith.addf %22, %23 : vector<8x128xf32>
    %cst_8 = arith.constant 0.000000e+00 : f32
    %25 = vector.broadcast %cst_8 : f32 to vector<8x128xf32>
    %26 = arith.maximumf %24, %25 : vector<8x128xf32>
    %27 = vector.extract_strided_slice %26 {offsets = [0, 0], sizes = [8, 126], strides = [1, 1]} : vector<8x128xf32> to vector<8x126xf32>
    %28 = tpu.concatenate %5, %27 in 1 : vector<8x2xf32>, vector<8x126xf32> -> vector<8x128xf32>
    %29 = arith.select %13, %28, %6 : vector<8x128xi1>, vector<8x128xf32>
    %30 = vector.extract_strided_slice %5 {offsets = [0, 0], sizes = [8, 1], strides = [1, 1]} : vector<8x2xf32> to vector<8x1xf32>
    %31 = vector.extract_strided_slice %26 {offsets = [0, 0], sizes = [8, 127], strides = [1, 1]} : vector<8x128xf32> to vector<8x127xf32>
    %32 = tpu.concatenate %30, %31 in 1 : vector<8x1xf32>, vector<8x127xf32> -> vector<8x128xf32>
    %33 = arith.select %11, %32, %6 : vector<8x128xi1>, vector<8x128xf32>
    %34 = tpu.concatenate %29, %33, %26 in 0 : vector<8x128xf32>, vector<8x128xf32>, vector<8x128xf32> -> vector<24x128xf32>
    %cst_9 = arith.constant dense<0.000000e+00> : vector<8x128xf32>
    %35 = tpu.matmul %2, %34, %cst_9 {dimension_numbers = #tpu.dot_dimension_numbers<[1], [0], [0], [1], [0, 0, 1, 1], [], []>} : vector<8x24xf32>, vector<24x128xf32>, vector<8x128xf32> -> vector<8x128xf32>
    %36 = vector.broadcast %4 : vector<8x1xf32> to vector<8x128xf32>
    %37 = arith.addf %35, %36 : vector<8x128xf32>
    %cst_10 = arith.constant 0.000000e+00 : f32
    %38 = vector.broadcast %cst_10 : f32 to vector<8x128xf32>
    %39 = arith.maximumf %37, %38 : vector<8x128xf32>
    %40 = arith.addf %39, %0 : vector<8x128xf32>
    %cst_11 = arith.constant 0.000000e+00 : f32
    %41 = vector.broadcast %cst_11 : f32 to vector<8x128xf32>
    %42 = arith.maximumf %40, %41 : vector<8x128xf32>
    %c0_12 = arith.constant 0 : index
    %c0_13 = arith.constant 0 : index
    %43 = vector.load %arg2[%c0_12, %c0_13] : memref<8x128xf32, #tpu.memory_space<vmem>>, vector<8x128xf32>
    tpu.vector_store %arg2[%c0_12, %c0_13], %42 {strides = array<i32>} : memref<8x128xf32, #tpu.memory_space<vmem>>, vector<8x128xf32>,
    return
  }
}

</mosaic_0001>

<llo_original>
// kernel: basic_block.1
$region0: #{basic_block.1}
  #allocation0 [shape = 'u32[]', space=smem, size = 0x4, offset = 0x4, fixed_abs, tag = 'smem constant byte address 0x4 - core index']
  #allocation1 [shape = 'u32[72,128]{1,0:T(1,128)}', space=vmem, size = 0x9000, scoped, tag = 'internal scratch']
  %s0 = inlined_call_operand.vmem [shape: f32[8,128], index: 0, kind: input, shape index: {}]
  %s1 = inlined_call_operand.vmem [shape: f32[8,128], index: 1, kind: input, shape index: {}]
  %s2 = inlined_call_operand.vmem [shape: f32[8,128], index: 2, kind: output, shape index: {}]
  %s3 = sld [smem:[#allocation0]]
  $region18: #{basic_block.1} parent=0
    _
  %s5 = ssub.s32 1, %s3
  %s6 = scalar_select 0, %s5, %s3
  // Predicated region
  $region2: #{basic_block.1} parent=0 // pred_check
    _
  $region3: #{basic_block.1} parent=0 // pred_check_branch
    %8 = sbr.rel (0) target = $region5
  $region4: #{basic_block.1} parent=0 // pred_region
    _
  $region5: #{basic_block.1} parent=0 // pred_fallthru
    _
  // Predicated region
  $region6: #{basic_block.1} parent=0 // pred_check
    _
  $region7: #{basic_block.1} parent=0 // pred_check_branch
    %10 = sbr.rel (0) target = $region9
  $region8: #{basic_block.1} parent=0 // pred_region
    _
  $region9: #{basic_block.1} parent=0 // pred_fallthru
    _
  %v11 = vld [vmem:[%s0] sm:$0xff]
  %v12 = vld [vmem:[%s1] sm:$0xff]
  %v13 = vlaneseq
  %v14 = vand.u32 %v13, 127
  %v15 = vand.u32 %v14, 15
  %vm16 = vcmp.ge.s32.totalorder %v15, 1
  %vm17 = vcmp.ge.s32.totalorder %v15, 2
  %19 = vrot.lane.b32.xlu0 %v11, 2
  %v20 = vpop.permute.xlu0 %19
  %vm22 = vcmask 15360
  %v23 = vsel %vm22, 0.0, %v20
  %v24 = vsel %vm17, %v23, 0.0
  %25 = vrot.lane.b32.xlu0 %v11, 1
  %v26 = vpop.permute.xlu0 %25
  %vm28 = vcmask 7168
  %v29 = vsel %vm28, 0.0, %v26
  %v30 = vsel %vm16, %v29, 0.0
  %32 = vset.pattern.permute.xlu0 48
  %33 = vperm.xlu0 %32, %v12
  %v34 = vpop.permute.xlu0 %33
  %vm36 = vcmask 195584
  %v37 = vsel %vm36, %v12, 0
  %39 = vmatpush.msra.mxu0 0.0
  %40 = vmatpush.msra.mxu0 0.0
  %41 = vmatpush.msra.mxu0 0.0
  %42 = vmatpush.msra.mxu0 0.0
  %43 = vmatpush.msra.mxu0 0.0
  %44 = vmatpush.msra.mxu0 0.0
  %45 = vmatpush.msra.mxu0 0.0
  %46 = vmatpush.msra.mxu0 0.0
  %47 = vmatpush.msra.mxu0 0.0
  %48 = vmatpush.msra.mxu0 0.0
  %49 = vmatpush.msra.mxu0 0.0
  %50 = vmatpush.msra.mxu0 0.0
  %51 = vmatpush.msra.mxu0 0.0
  %52 = vmatpush.msra.mxu0 %v11
  %53 = vmatpush.msra.mxu0 %v30
  %54 = vmatpush.msra.mxu0 %v24
  %55 = vmatmul.f32.gmra.mxu0 %v37
  %v56 = vpop.f32.mrf.mxu0
  %v57 = vadd.f32 %v34, %v56
  %58 = vdwg.mxu0
  %v59 = vmax.f32 %v57, 0.0
  %61 = vrot.lane.b32.xlu0 %v59, 2
  %v62 = vpop.permute.xlu0 %61
  %v64 = vsel %vm22, 0.0, %v62
  %v65 = vsel %vm17, %v64, 0.0
  %66 = vrot.lane.b32.xlu0 %v59, 1
  %v67 = vpop.permute.xlu0 %66
  %v69 = vsel %vm28, 0.0, %v67
  %v70 = vsel %vm16, %v69, 0.0
  %71 = vset.pattern.permute.xlu0 49
  %72 = vperm.xlu0 %71, %v12
  %v73 = vpop.permute.xlu0 %72
  %75 = vrot.lane.b32.xlu0 %v12, 104
  %v76 = vpop.permute.xlu0 %75
  %v77 = vsel %vm36, %v76, 0
  %79 = vmatpush.msra.mxu0 0.0
  %80 = vmatpush.msra.mxu0 0.0
  %81 = vmatpush.msra.mxu0 0.0
  %82 = vmatpush.msra.mxu0 0.0
  %83 = vmatpush.msra.mxu0 0.0
  %84 = vmatpush.msra.mxu0 0.0
  %85 = vmatpush.msra.mxu0 0.0
  %86 = vmatpush.msra.mxu0 0.0
  %87 = vmatpush.msra.mxu0 0.0
  %88 = vmatpush.msra.mxu0 0.0
  %89 = vmatpush.msra.mxu0 0.0
  %90 = vmatpush.msra.mxu0 0.0
  %91 = vmatpush.msra.mxu0 0.0
  %92 = vmatpush.msra.mxu0 %v59
  %93 = vmatpush.msra.mxu0 %v70
  %94 = vmatpush.msra.mxu0 %v65
  %95 = vmatmul.f32.gmra.mxu0 %v77
  %v96 = vpop.f32.mrf.mxu0
  %v97 = vadd.f32 %v73, %v96
  %98 = vdwg.mxu0
  %v99 = vmax.f32 %v97, 0.0
  %v100 = vadd.f32 %v99, %v11
  %v101 = vmax.f32 %v100, 0.0
  %102 = vst [vmem:[%s2] sm:$0xff] %v101
  // Predicated region
  $region10: #{basic_block.1} parent=0 // pred_check
    _
  $region11: #{basic_block.1} parent=0 // pred_check_branch
    %104 = sbr.rel (0) target = $region13
  $region12: #{basic_block.1} parent=0 // pred_region
    _
  $region13: #{basic_block.1} parent=0 // pred_fallthru
    _
  // Predicated region
  $region14: #{basic_block.1} parent=0 // pred_check
    _
  $region15: #{basic_block.1} parent=0 // pred_check_branch
    %106 = sbr.rel (0) target = $region17
  $region16: #{basic_block.1} parent=0 // pred_region
    _
  $region17: #{basic_block.1} parent=0 // pred_fallthru
    _

</llo_original>
